<compile_context>
chip_gen: v5e
topology: v5e:2x2
jax: 0.10.0
libtpu: 0.0.40
codegen_flags: <defaults>
</compile_context>

<pallas_src>
import math
import functools

import jax
import jax.numpy as jnp
from jax.experimental import pallas as pl
from jax.experimental.pallas import tpu as pltpu


def _round_up(x: int, m: int) -> int:
    return (x + m - 1) // m * m


def _conv_fused_kernel(a_ref, b_ref, bias_ref, o_ref):
    """Single-pass matmul: whole K in one MXU sweep, bias add + cast fused.

    The weight block index is constant along the inner (M) grid axis, so the
    reordered weights are DMA'd from HBM only once per O tile and stay
    resident in VMEM while the patch tiles stream past.
    """
    acc = jnp.dot(a_ref[...], b_ref[...], preferred_element_type=jnp.float32)
    o_ref[...] = (acc + bias_ref[...].astype(jnp.float32)).astype(o_ref.dtype)


def _conv_matmul_kernel(a_ref, b_ref, bias_ref, o_ref, acc_ref):
    """Fallback for large K: tiled matmul with f32 accumulator in scratch."""
    k = pl.program_id(2)

    @pl.when(k == 0)
    def _():
        acc_ref[...] = jnp.zeros_like(acc_ref)

    acc_ref[...] += jnp.dot(
        a_ref[...], b_ref[...], preferred_element_type=jnp.float32
    )

    @pl.when(k == pl.num_programs(2) - 1)
    def _():
        # Bias add + cast happen once per output tile (not per K step).
        o_ref[...] = (acc_ref[...] + bias_ref[...].astype(jnp.float32)).astype(
            o_ref.dtype
        )


@functools.partial(
    jax.jit,
    static_argnames=("stride", "padding", "dilation", "is_bias", "compute_dtype"),
)
def conv2d_forward(
    x, weight, bias, *, stride=1, padding=0, dilation=1, is_bias=True,
    compute_dtype=jnp.bfloat16,
):
    """Semantics of Conv.forward: standard 2D conv, NCHW in / NCHW out.

    compute_dtype: dtype of the patch / weight operands fed to the MXU
    (default bfloat16; accumulation and bias add stay in float32 and the
    output keeps x.dtype).  Pass jnp.float32 for bit-tight results.
    """
    N, C, H, W = x.shape
    O, _, kH, kW = weight.shape
    Ho = (H + 2 * padding - dilation * (kH - 1) - 1) // stride + 1
    Wo = (W + 2 * padding - dilation * (kW - 1) - 1) // stride + 1

    xp = jnp.pad(x, ((0, 0), (0, 0), (padding, padding), (padding, padding)))

    # Single NCHW -> NHWC transform, then gather the kH*kW taps directly into
    # the final (kh, kw, c) contraction order (lane dim stays contiguous C).
    x_nhwc = jnp.transpose(xp, (0, 2, 3, 1))  # (N, Hp, Wp, C)
    cols = []
    for kh in range(kH):
        for kw in range(kW):
            h0 = kh * dilation
            w0 = kw * dilation
            sl = jax.lax.slice(
                x_nhwc,
                (0, h0, w0, 0),
                (N, h0 + stride * (Ho - 1) + 1, w0 + stride * (Wo - 1) + 1, C),
                (1, stride, stride, 1),
            )  # (N, Ho, Wo, C)
            cols.append(sl)
    patches = jnp.concatenate(cols, axis=-1)            # (N, Ho, Wo, kH*kW*C)
    patches = patches.reshape(N * Ho * Wo, kH * kW * C)  # (M, K)

    # Weight reordered (cheap: weight is small) to match the (kh, kw, c) order.
    w2 = jnp.transpose(weight, (2, 3, 1, 0)).reshape(kH * kW * C, O)  # (K, O)

    if is_bias and bias is not None:
        bias_eff = bias.astype(jnp.float32)
    else:
        bias_eff = jnp.zeros((O,), jnp.float32)

    M, K = patches.shape

    cdtype = jnp.dtype(x.dtype if compute_dtype is None else compute_dtype)
    cbytes = cdtype.itemsize
    # Sub-32-bit dtypes pack rows along sublanes: keep tm a multiple of 16
    # (32 for 8-bit) so packed vregs are fully populated.
    row_align = 8 if cbytes >= 4 else (16 if cbytes == 2 else 32)

    # Tile sizes: as large as comfortably fits the 32 MiB scoped VMEM budget
    # (double-buffered inputs + output) on every generation, lane-dense output.
    tm = min(512, _round_up(M, row_align))
    tn = min(512, _round_up(O, 128))
    Kp = _round_up(K, 128)
    small_k = Kp <= 2048   # common conv case: whole K fits one VMEM pass

    if not small_k:
        tk = 1024
        Kp = _round_up(K, tk)

    Mp = _round_up(M, tm)
    Op = _round_up(O, tn)

    patches_p = jnp.pad(patches.astype(cdtype), ((0, Mp - M), (0, Kp - K)))
    w2_p = jnp.pad(w2.astype(cdtype), ((0, Kp - K), (0, Op - O)))
    bias2 = jnp.pad(bias_eff.reshape(1, O), ((0, 0), (0, Op - O)))

    compiler_params = pltpu.CompilerParams(
        dimension_semantics=(
            ("parallel", "parallel") if small_k
            else ("parallel", "parallel", "arbitrary")
        ),
        # v5e's default scoped VMEM is 16 MiB; be explicit so the larger tiles
        # fit.  32 MiB is still safe on v7x (64 MiB physical per TC).
        vmem_limit_bytes=32 * 1024 * 1024,
    )

    if small_k:
        ni = Mp // tm
        nj = Op // tn
        a_kw = {}
        if ni >= 3:
            # Deeper pipelining on the streamed patches input (cheap in VMEM,
            # smooths DMA jitter on bandwidth-poor v5e).
            a_kw["pipeline_mode"] = pl.Buffered(3)
        out_flat = pl.pallas_call(
            _conv_fused_kernel,
            out_shape=jax.ShapeDtypeStruct((Mp, Op), x.dtype),
            grid_spec=pltpu.PrefetchScalarGridSpec(
                num_scalar_prefetch=0,
                # O tiles outer, M tiles inner -> weight/bias block indices are
                # constant along the inner axis (DMA'd once per O tile).
                grid=(nj, ni),
                in_specs=[
                    pl.BlockSpec((tm, Kp), lambda j, i: (i, 0), **a_kw),  # patches
                    pl.BlockSpec((Kp, tn), lambda j, i: (0, j)),          # weights
                    pl.BlockSpec((1, tn), lambda j, i: (0, j)),           # bias
                ],
                out_specs=pl.BlockSpec((tm, tn), lambda j, i: (i, j)),
            ),
            compiler_params=compiler_params,
        )(patches_p, w2_p, bias2)
    else:
        grid = (Mp // tm, Op // tn, Kp // tk)
        out_flat = pl.pallas_call(
            _conv_matmul_kernel,
            out_shape=jax.ShapeDtypeStruct((Mp, Op), x.dtype),
            grid_spec=pltpu.PrefetchScalarGridSpec(
                num_scalar_prefetch=0,
                grid=grid,
                in_specs=[
                    pl.BlockSpec((tm, tk), lambda i, j, k: (i, k)),   # patches
                    pl.BlockSpec((tk, tn), lambda i, j, k: (k, j)),   # weights
                    pl.BlockSpec((1, tn), lambda i, j, k: (0, j)),    # bias
                ],
                out_specs=pl.BlockSpec((tm, tn), lambda i, j, k: (i, j)),
                scratch_shapes=[pltpu.VMEM((tm, tn), jnp.float32)],
            ),
            compiler_params=compiler_params,
        )(patches_p, w2_p, bias2)

    out = out_flat[:M, :O].reshape(N, Ho, Wo, O)
    return jnp.transpose(out, (0, 3, 1, 2))  # back to NCHW


def init_conv_params(key, in_channels, out_channels, kernel_size, is_bias=True):
    """Deterministic re-implementation of Conv._initialize_weights (PyTorch)."""
    fan_in = in_channels * kernel_size * kernel_size
    wkey, bkey = jax.random.split(key)
    # kaiming_uniform_ with a=sqrt(5) -> bound = sqrt(6 / ((1 + a^2) * fan_in))
    wbound = math.sqrt(6.0 / ((1.0 + 5.0) * fan_in))
    weight = jax.random.uniform(
        wkey, (out_channels, in_channels, kernel_size, kernel_size),
        jnp.float32, -wbound, wbound)
    bbound = (1.0 / math.sqrt(fan_in)) if (fan_in > 0 and is_bias) else 0.0
    bias = jax.random.uniform(bkey, (out_channels,), jnp.float32, -bbound, bbound)
    return weight, bias


if __name__ == "__main__":
    # Small shapes consistent with the module: batch=2, in_ch=4, spatial=16x16.
    in_channels, out_channels = 4, 8
    kernel_size, padding, stride, dilation, is_bias = 3, 0, 1, 1, True

    key = jax.random.PRNGKey(0)
    kx, kp = jax.random.split(key)
    x = jax.random.normal(kx, (2, in_channels, 16, 16), jnp.float32)
    weight, bias = init_conv_params(kp, in_channels, out_channels, kernel_size,
                                    is_bias)

    # Reference: XLA's native convolution (same semantics as the module).
    ref = jax.lax.conv_general_dilated(
        x, weight, window_strides=(stride, stride),
        padding=[(padding, padding), (padding, padding)],
        rhs_dilation=(dilation, dilation),
        dimension_numbers=("NCHW", "OIHW", "NCHW"))
    if is_bias:
        ref = ref + bias[None, :, None, None]

    # 1) f32 compute path: tight tolerance.
    out_f32 = conv2d_forward(x, weight, bias, stride=stride, padding=padding,
                             dilation=dilation, is_bias=is_bias,
                             compute_dtype=jnp.float32)
    out_f32 = jax.block_until_ready(out_f32)
    assert out_f32.shape == ref.shape, (out_f32.shape, ref.shape)
    err32 = float(jnp.max(jnp.abs(out_f32 - ref)))
    assert jnp.allclose(out_f32, ref, atol=1e-4, rtol=1e-4), err32

    # 2) Default bf16 MXU path (f32 accumulate): bf16-appropriate tolerance.
    out_bf16 = conv2d_forward(x, weight, bias, stride=stride, padding=padding,
                              dilation=dilation, is_bias=is_bias)
    out_bf16 = jax.block_until_ready(out_bf16)
    assert out_bf16.shape == ref.shape, (out_bf16.shape, ref.shape)
    err16 = float(jnp.max(jnp.abs(out_bf16 - ref)))
    assert jnp.allclose(out_bf16, ref, atol=3e-2, rtol=3e-2), err16

    print("KERNEL_OK")
</pallas_src>

<mosaic_0001>
module attributes {stable_mosaic.version = 11 : i64} {
  func.func @_conv_fused_kernel(%arg0: i32, %arg1: i32, %arg2: memref<392x128xf32, #tpu.memory_space<vmem>>, %arg3: memref<128x128xf32, #tpu.memory_space<vmem>>, %arg4: memref<1x128xf32, #tpu.memory_space<vmem>>, %arg5: memref<392x128xf32, #tpu.memory_space<vmem>>) attributes {dimension_semantics = [#tpu.dimension_semantics<parallel>, #tpu.dimension_semantics<parallel>], iteration_bounds = array<i64: 1, 1>, scalar_prefetch = 0 : i64, scratch_operands = 0 : i64, tpu.core_type = #tpu.core_type<tc>, window_params = [{transform_indices = @transform_0, window_bounds = array<i64: 392, 128>}, {transform_indices = @transform_1, window_bounds = array<i64: 128, 128>}, {transform_indices = @transform_2, window_bounds = array<i64: 1, 128>}, {transform_indices = @transform_3, window_bounds = array<i64: 392, 128>}]} {
    %c0 = arith.constant 0 : index
    %c0_0 = arith.constant 0 : index
    %0 = vector.load %arg2[%c0, %c0_0] : memref<392x128xf32, #tpu.memory_space<vmem>>, vector<392x128xf32>
    %c0_1 = arith.constant 0 : index
    %c0_2 = arith.constant 0 : index
    %1 = vector.load %arg3[%c0_1, %c0_2] : memref<128x128xf32, #tpu.memory_space<vmem>>, vector<128x128xf32>
    %cst = arith.constant dense<0.000000e+00> : vector<392x128xf32>
    %2 = tpu.matmul %0, %1, %cst {dimension_numbers = #tpu.dot_dimension_numbers<[1], [0], [0], [1], [0, 0, 1, 1], [], []>} : vector<392x128xf32>, vector<128x128xf32>, vector<392x128xf32> -> vector<392x128xf32>
    %c0_3 = arith.constant 0 : index
    %c0_4 = arith.constant 0 : index
    %3 = vector.load %arg4[%c0_3, %c0_4] : memref<1x128xf32, #tpu.memory_space<vmem>>, vector<1x128xf32>
    %4 = vector.broadcast %3 : vector<1x128xf32> to vector<392x128xf32>
    %5 = arith.addf %2, %4 : vector<392x128xf32>
    %c0_5 = arith.constant 0 : index
    %c0_6 = arith.constant 0 : index
    %6 = vector.load %arg5[%c0_5, %c0_6] : memref<392x128xf32, #tpu.memory_space<vmem>>, vector<392x128xf32>
    tpu.vector_store %arg5[%c0_5, %c0_6], %5 {strides = array<i32>} : memref<392x128xf32, #tpu.memory_space<vmem>>, vector<392x128xf32>,
    return
  }
  func.func @transform_0(%arg0: i32, %arg1: i32) -> (i32, i32) {
    %c0_i32 = arith.constant 0 : i32
    %c0_i32_0 = arith.constant 0 : i32
    return %arg1, %c0_i32 : i32, i32
  }
  func.func @transform_1(%arg0: i32, %arg1: i32) -> (i32, i32) {
    %c0_i32 = arith.constant 0 : i32
    %c0_i32_0 = arith.constant 0 : i32
    return %c0_i32, %arg0 : i32, i32
  }
  func.func @transform_2(%arg0: i32, %arg1: i32) -> (i32, i32) {
    %c0_i32 = arith.constant 0 : i32
    %c0_i32_0 = arith.constant 0 : i32
    return %c0_i32, %arg0 : i32, i32
  }
  func.func @transform_3(%arg0: i32, %arg1: i32) -> (i32, i32) {
    %c0_i32 = arith.constant 0 : i32
    return %arg1, %arg0 : i32, i32
  }
}

</mosaic_0001>

<llo_original>
// kernel: conv2d_forward.1
$region0: #{conv2d_forward.1}
  #allocation0 [shape = 'u32[]', space=smem, size = 0x4, offset = 0x4, fixed_abs, tag = 'smem constant byte address 0x4 - core index']
  #allocation1 [shape = 'u32[72,128]{1,0:T(1,128)}', space=vmem, size = 0x9000, scoped, tag = 'internal scratch']
  %s0 = inlined_call_operand.vmem [shape: f32[392,128], index: 0, kind: input, shape index: {}]
  %s1 = inlined_call_operand.vmem [shape: f32[128,128], index: 1, kind: input, shape index: {}]
  %s2 = inlined_call_operand.vmem [shape: f32[1,128], index: 2, kind: input, shape index: {}]
  %s3 = inlined_call_operand.vmem [shape: f32[392,128], index: 3, kind: output, shape index: {}]
  %s4 = sld [smem:[#allocation0]]
  $region22: #{conv2d_forward.1} parent=0
    _
  %s6 = ssub.s32 1, %s4
  %s7 = scalar_select 0, %s6, %s4
  // Predicated region
  $region2: #{conv2d_forward.1} parent=0 // pred_check
    _
  $region3: #{conv2d_forward.1} parent=0 // pred_check_branch
    %9 = sbr.rel (0) target = $region5
  $region4: #{conv2d_forward.1} parent=0 // pred_region
    _
  $region5: #{conv2d_forward.1} parent=0 // pred_fallthru
    _
  // Predicated region
  $region6: #{conv2d_forward.1} parent=0 // pred_check
    _
  $region7: #{conv2d_forward.1} parent=0 // pred_check_branch
    %11 = sbr.rel (0) target = $region9
  $region8: #{conv2d_forward.1} parent=0 // pred_region
    _
  $region9: #{conv2d_forward.1} parent=0 // pred_fallthru
    _
  // Predicated region
  $region10: #{conv2d_forward.1} parent=0 // pred_check
    _
  $region11: #{conv2d_forward.1} parent=0 // pred_check_branch
    %13 = sbr.rel (0) target = $region13
  $region12: #{conv2d_forward.1} parent=0 // pred_region
    _
  $region13: #{conv2d_forward.1} parent=0 // pred_fallthru
    _
  %v14 = vld [vmem:[%s0] sm:$0xff]
  %v15 = vld [vmem:[%s0 + $0x8] sm:$0xff]
  %v16 = vld [vmem:[%s0 + $0x10] sm:$0xff]
  %v17 = vld [vmem:[%s0 + $0x18] sm:$0xff]
  %v18 = vld [vmem:[%s0 + $0x20] sm:$0xff]
  %v19 = vld [vmem:[%s0 + $0x28] sm:$0xff]
  %v20 = vld [vmem:[%s0 + $0x30] sm:$0xff]
  %v21 = vld [vmem:[%s0 + $0x38] sm:$0xff]
  %v22 = vld [vmem:[%s0 + $0x40] sm:$0xff]
  %v23 = vld [vmem:[%s0 + $0x48] sm:$0xff]
  %v24 = vld [vmem:[%s0 + $0x50] sm:$0xff]
  %v25 = vld [vmem:[%s0 + $0x58] sm:$0xff]
  %v26 = vld [vmem:[%s0 + $0x60] sm:$0xff]
  %v27 = vld [vmem:[%s0 + $0x68] sm:$0xff]
  %v28 = vld [vmem:[%s0 + $0x70] sm:$0xff]
  %v29 = vld [vmem:[%s0 + $0x78] sm:$0xff]
  %v30 = vld [vmem:[%s0 + $0x80] sm:$0xff]
  %v31 = vld [vmem:[%s0 + $0x88] sm:$0xff]
  %v32 = vld [vmem:[%s0 + $0x90] sm:$0xff]
  %v33 = vld [vmem:[%s0 + $0x98] sm:$0xff]
  %v34 = vld [vmem:[%s0 + $0xa0] sm:$0xff]
  %v35 = vld [vmem:[%s0 + $0xa8] sm:$0xff]
  %v36 = vld [vmem:[%s0 + $0xb0] sm:$0xff]
  %v37 = vld [vmem:[%s0 + $0xb8] sm:$0xff]
  %v38 = vld [vmem:[%s0 + $0xc0] sm:$0xff]
  %v39 = vld [vmem:[%s0 + $0xc8] sm:$0xff]
  %v40 = vld [vmem:[%s0 + $0xd0] sm:$0xff]
  %v41 = vld [vmem:[%s0 + $0xd8] sm:$0xff]
  %v42 = vld [vmem:[%s0 + $0xe0] sm:$0xff]
  %v43 = vld [vmem:[%s0 + $0xe8] sm:$0xff]
  %v44 = vld [vmem:[%s0 + $0xf0] sm:$0xff]
  %v45 = vld [vmem:[%s0 + $0xf8] sm:$0xff]
  %v46 = vld [vmem:[%s0 + $0x100] sm:$0xff]
  %v47 = vld [vmem:[%s0 + $0x108] sm:$0xff]
  %v48 = vld [vmem:[%s0 + $0x110] sm:$0xff]
  %v49 = vld [vmem:[%s0 + $0x118] sm:$0xff]
  %v50 = vld [vmem:[%s0 + $0x120] sm:$0xff]
  %v51 = vld [vmem:[%s0 + $0x128] sm:$0xff]
  %v52 = vld [vmem:[%s0 + $0x130] sm:$0xff]
  %v53 = vld [vmem:[%s0 + $0x138] sm:$0xff]
  %v54 = vld [vmem:[%s0 + $0x140] sm:$0xff]
  %v55 = vld [vmem:[%s0 + $0x148] sm:$0xff]
  %v56 = vld [vmem:[%s0 + $0x150] sm:$0xff]
  %v57 = vld [vmem:[%s0 + $0x158] sm:$0xff]
  %v58 = vld [vmem:[%s0 + $0x160] sm:$0xff]
  %v59 = vld [vmem:[%s0 + $0x168] sm:$0xff]
  %v60 = vld [vmem:[%s0 + $0x170] sm:$0xff]
  %v61 = vld [vmem:[%s0 + $0x178] sm:$0xff]
  %v62 = vld [vmem:[%s0 + $0x180] sm:$0xff]
  %v63 = vld [vmem:[%s1] sm:$0xff]
  %v64 = vld [vmem:[%s1 + $0x8] sm:$0xff]
  %v65 = vld [vmem:[%s1 + $0x10] sm:$0xff]
  %v66 = vld [vmem:[%s1 + $0x18] sm:$0xff]
  %v67 = vld [vmem:[%s1 + $0x20] sm:$0xff]
  %v68 = vld [vmem:[%s1 + $0x28] sm:$0xff]
  %v69 = vld [vmem:[%s1 + $0x30] sm:$0xff]
  %v70 = vld [vmem:[%s1 + $0x38] sm:$0xff]
  %v71 = vld [vmem:[%s1 + $0x40] sm:$0xff]
  %v72 = vld [vmem:[%s1 + $0x48] sm:$0xff]
  %v73 = vld [vmem:[%s1 + $0x50] sm:$0xff]
  %v74 = vld [vmem:[%s1 + $0x58] sm:$0xff]
  %v75 = vld [vmem:[%s1 + $0x60] sm:$0xff]
  %v76 = vld [vmem:[%s1 + $0x68] sm:$0xff]
  %v77 = vld [vmem:[%s1 + $0x70] sm:$0xff]
  %v78 = vld [vmem:[%s1 + $0x78] sm:$0xff]
  %v79 = vld [vmem:[%s2] sm:$0x1]
  %v81 = vperm.slane %v79, 0
  %83 = vmatpush.msra.mxu0 %v78
  %84 = vmatpush.msra.mxu0 %v77
  %85 = vmatpush.msra.mxu0 %v76
  %86 = vmatpush.msra.mxu0 %v75
  %87 = vmatpush.msra.mxu0 %v74
  %88 = vmatpush.msra.mxu0 %v73
  %89 = vmatpush.msra.mxu0 %v72
  %90 = vmatpush.msra.mxu0 %v71
  %91 = vmatpush.msra.mxu0 %v70
  %92 = vmatpush.msra.mxu0 %v69
  %93 = vmatpush.msra.mxu0 %v68
  %94 = vmatpush.msra.mxu0 %v67
  %95 = vmatpush.msra.mxu0 %v66
  %96 = vmatpush.msra.mxu0 %v65
  %97 = vmatpush.msra.mxu0 %v64
  %98 = vmatpush.msra.mxu0 %v63
  %99 = vmatmul.f32.gmra.mxu0 %v14
  %v100 = vpop.f32.mrf.mxu0
  %v101 = vadd.f32 %v81, %v100
  %102 = vmatmul.f32.gmra.mxu0 %v15
  %v103 = vpop.f32.mrf.mxu0
  %v104 = vadd.f32 %v81, %v103
  %105 = vmatmul.f32.gmra.mxu0 %v16
  %v106 = vpop.f32.mrf.mxu0
  %v107 = vadd.f32 %v81, %v106
  %108 = vmatmul.f32.gmra.mxu0 %v17
  %v109 = vpop.f32.mrf.mxu0
  %v110 = vadd.f32 %v81, %v109
  %111 = vmatmul.f32.gmra.mxu0 %v18
  %v112 = vpop.f32.mrf.mxu0
  %v113 = vadd.f32 %v81, %v112
  %114 = vmatmul.f32.gmra.mxu0 %v19
  %v115 = vpop.f32.mrf.mxu0
  %v116 = vadd.f32 %v81, %v115
  %117 = vmatmul.f32.gmra.mxu0 %v20
  %v118 = vpop.f32.mrf.mxu0
  %v119 = vadd.f32 %v81, %v118
  %120 = vmatmul.f32.gmra.mxu0 %v21
  %v121 = vpop.f32.mrf.mxu0
  %v122 = vadd.f32 %v81, %v121
  %123 = vmatmul.f32.gmra.mxu0 %v22
  %v124 = vpop.f32.mrf.mxu0
  %v125 = vadd.f32 %v81, %v124
  %126 = vmatmul.f32.gmra.mxu0 %v23
  %v127 = vpop.f32.mrf.mxu0
  %v128 = vadd.f32 %v81, %v127
  %129 = vmatmul.f32.gmra.mxu0 %v24
  %v130 = vpop.f32.mrf.mxu0
  %v131 = vadd.f32 %v81, %v130
  %132 = vmatmul.f32.gmra.mxu0 %v25
  %v133 = vpop.f32.mrf.mxu0
  %v134 = vadd.f32 %v81, %v133
  %135 = vmatmul.f32.gmra.mxu0 %v26
  %v136 = vpop.f32.mrf.mxu0
  %v137 = vadd.f32 %v81, %v136
  %138 = vmatmul.f32.gmra.mxu0 %v27
  %v139 = vpop.f32.mrf.mxu0
  %v140 = vadd.f32 %v81, %v139
  %141 = vmatmul.f32.gmra.mxu0 %v28
  %v142 = vpop.f32.mrf.mxu0
  %v143 = vadd.f32 %v81, %v142
  %144 = vmatmul.f32.gmra.mxu0 %v29
  %v145 = vpop.f32.mrf.mxu0
  %v146 = vadd.f32 %v81, %v145
  %147 = vmatmul.f32.gmra.mxu0 %v30
  %v148 = vpop.f32.mrf.mxu0
  %v149 = vadd.f32 %v81, %v148
  %150 = vmatmul.f32.gmra.mxu0 %v31
  %v151 = vpop.f32.mrf.mxu0
  %v152 = vadd.f32 %v81, %v151
  %153 = vmatmul.f32.gmra.mxu0 %v32
  %v154 = vpop.f32.mrf.mxu0
  %v155 = vadd.f32 %v81, %v154
  %156 = vmatmul.f32.gmra.mxu0 %v33
  %v157 = vpop.f32.mrf.mxu0
  %v158 = vadd.f32 %v81, %v157
  %159 = vmatmul.f32.gmra.mxu0 %v34
  %v160 = vpop.f32.mrf.mxu0
  %v161 = vadd.f32 %v81, %v160
  %162 = vmatmul.f32.gmra.mxu0 %v35
  %v163 = vpop.f32.mrf.mxu0
  %v164 = vadd.f32 %v81, %v163
  %165 = vmatmul.f32.gmra.mxu0 %v36
  %v166 = vpop.f32.mrf.mxu0
  %v167 = vadd.f32 %v81, %v166
  %168 = vmatmul.f32.gmra.mxu0 %v37
  %v169 = vpop.f32.mrf.mxu0
  %v170 = vadd.f32 %v81, %v169
  %171 = vmatmul.f32.gmra.mxu0 %v38
  %v172 = vpop.f32.mrf.mxu0
  %v173 = vadd.f32 %v81, %v172
  %174 = vmatmul.f32.gmra.mxu0 %v39
  %v175 = vpop.f32.mrf.mxu0
  %v176 = vadd.f32 %v81, %v175
  %177 = vmatmul.f32.gmra.mxu0 %v40
  %v178 = vpop.f32.mrf.mxu0
  %v179 = vadd.f32 %v81, %v178
  %180 = vmatmul.f32.gmra.mxu0 %v41
  %v181 = vpop.f32.mrf.mxu0
  %v182 = vadd.f32 %v81, %v181
  %183 = vmatmul.f32.gmra.mxu0 %v42
  %v184 = vpop.f32.mrf.mxu0
  %v185 = vadd.f32 %v81, %v184
  %186 = vmatmul.f32.gmra.mxu0 %v43
  %v187 = vpop.f32.mrf.mxu0
  %v188 = vadd.f32 %v81, %v187
  %189 = vmatmul.f32.gmra.mxu0 %v44
  %v190 = vpop.f32.mrf.mxu0
  %v191 = vadd.f32 %v81, %v190
  %192 = vmatmul.f32.gmra.mxu0 %v45
  %v193 = vpop.f32.mrf.mxu0
  %v194 = vadd.f32 %v81, %v193
  %195 = vmatmul.f32.gmra.mxu0 %v46
  %v196 = vpop.f32.mrf.mxu0
  %v197 = vadd.f32 %v81, %v196
  %198 = vmatmul.f32.gmra.mxu0 %v47
  %v199 = vpop.f32.mrf.mxu0
  %v200 = vadd.f32 %v81, %v199
  %201 = vmatmul.f32.gmra.mxu0 %v48
  %v202 = vpop.f32.mrf.mxu0
  %v203 = vadd.f32 %v81, %v202
  %204 = vmatmul.f32.gmra.mxu0 %v49
  %v205 = vpop.f32.mrf.mxu0
  %v206 = vadd.f32 %v81, %v205
  %207 = vmatmul.f32.gmra.mxu0 %v50
  %v208 = vpop.f32.mrf.mxu0
  %v209 = vadd.f32 %v81, %v208
  %210 = vmatmul.f32.gmra.mxu0 %v51
  %v211 = vpop.f32.mrf.mxu0
  %v212 = vadd.f32 %v81, %v211
  %213 = vmatmul.f32.gmra.mxu0 %v52
  %v214 = vpop.f32.mrf.mxu0
  %v215 = vadd.f32 %v81, %v214
  %216 = vmatmul.f32.gmra.mxu0 %v53
  %v217 = vpop.f32.mrf.mxu0
  %v218 = vadd.f32 %v81, %v217
  %219 = vmatmul.f32.gmra.mxu0 %v54
  %v220 = vpop.f32.mrf.mxu0
  %v221 = vadd.f32 %v81, %v220
  %222 = vmatmul.f32.gmra.mxu0 %v55
  %v223 = vpop.f32.mrf.mxu0
  %v224 = vadd.f32 %v81, %v223
  %225 = vmatmul.f32.gmra.mxu0 %v56
  %v226 = vpop.f32.mrf.mxu0
  %v227 = vadd.f32 %v81, %v226
  %228 = vmatmul.f32.gmra.mxu0 %v57
  %v229 = vpop.f32.mrf.mxu0
  %v230 = vadd.f32 %v81, %v229
  %231 = vmatmul.f32.gmra.mxu0 %v58
  %v232 = vpop.f32.mrf.mxu0
  %v233 = vadd.f32 %v81, %v232
  %234 = vmatmul.f32.gmra.mxu0 %v59
  %v235 = vpop.f32.mrf.mxu0
  %v236 = vadd.f32 %v81, %v235
  %237 = vmatmul.f32.gmra.mxu0 %v60
  %v238 = vpop.f32.mrf.mxu0
  %v239 = vadd.f32 %v81, %v238
  %240 = vmatmul.f32.gmra.mxu0 %v61
  %v241 = vpop.f32.mrf.mxu0
  %v242 = vadd.f32 %v81, %v241
  %243 = vmatmul.f32.gmra.mxu0 %v62
  %v244 = vpop.f32.mrf.mxu0
  %v245 = vadd.f32 %v81, %v244
  %246 = vdwg.mxu0
  %247 = vst [vmem:[%s3] sm:$0xff] %v101
  %248 = vst [vmem:[%s3 + $0x8] sm:$0xff] %v104
  %249 = vst [vmem:[%s3 + $0x10] sm:$0xff] %v107
  %250 = vst [vmem:[%s3 + $0x18] sm:$0xff] %v110
  %251 = vst [vmem:[%s3 + $0x20] sm:$0xff] %v113
  %252 = vst [vmem:[%s3 + $0x28] sm:$0xff] %v116
  %253 = vst [vmem:[%s3 + $0x30] sm:$0xff] %v119
  %254 = vst [vmem:[%s3 + $0x38] sm:$0xff] %v122
  %255 = vst [vmem:[%s3 + $0x40] sm:$0xff] %v125
  %256 = vst [vmem:[%s3 + $0x48] sm:$0xff] %v128
  %257 = vst [vmem:[%s3 + $0x50] sm:$0xff] %v131
  %258 = vst [vmem:[%s3 + $0x58] sm:$0xff] %v134
  %259 = vst [vmem:[%s3 + $0x60] sm:$0xff] %v137
  %260 = vst [vmem:[%s3 + $0x68] sm:$0xff] %v140
  %261 = vst [vmem:[%s3 + $0x70] sm:$0xff] %v143
  %262 = vst [vmem:[%s3 + $0x78] sm:$0xff] %v146
  %263 = vst [vmem:[%s3 + $0x80] sm:$0xff] %v149
  %264 = vst [vmem:[%s3 + $0x88] sm:$0xff] %v152
  %265 = vst [vmem:[%s3 + $0x90] sm:$0xff] %v155
  %266 = vst [vmem:[%s3 + $0x98] sm:$0xff] %v158
  %267 = vst [vmem:[%s3 + $0xa0] sm:$0xff] %v161
  %268 = vst [vmem:[%s3 + $0xa8] sm:$0xff] %v164
  %269 = vst [vmem:[%s3 + $0xb0] sm:$0xff] %v167
  %270 = vst [vmem:[%s3 + $0xb8] sm:$0xff] %v170
  %271 = vst [vmem:[%s3 + $0xc0] sm:$0xff] %v173
  %272 = vst [vmem:[%s3 + $0xc8] sm:$0xff] %v176
  %273 = vst [vmem:[%s3 + $0xd0] sm:$0xff] %v179
  %274 = vst [vmem:[%s3 + $0xd8] sm:$0xff] %v182
  %275 = vst [vmem:[%s3 + $0xe0] sm:$0xff] %v185
  %276 = vst [vmem:[%s3 + $0xe8] sm:$0xff] %v188
  %277 = vst [vmem:[%s3 + $0xf0] sm:$0xff] %v191
  %278 = vst [vmem:[%s3 + $0xf8] sm:$0xff] %v194
  %279 = vst [vmem:[%s3 + $0x100] sm:$0xff] %v197
  %280 = vst [vmem:[%s3 + $0x108] sm:$0xff] %v200
  %281 = vst [vmem:[%s3 + $0x110] sm:$0xff] %v203
  %282 = vst [vmem:[%s3 + $0x118] sm:$0xff] %v206
  %283 = vst [vmem:[%s3 + $0x120] sm:$0xff] %v209
  %284 = vst [vmem:[%s3 + $0x128] sm:$0xff] %v212
  %285 = vst [vmem:[%s3 + $0x130] sm:$0xff] %v215
  %286 = vst [vmem:[%s3 + $0x138] sm:$0xff] %v218
  %287 = vst [vmem:[%s3 + $0x140] sm:$0xff] %v221
  %288 = vst [vmem:[%s3 + $0x148] sm:$0xff] %v224
  %289 = vst [vmem:[%s3 + $0x150] sm:$0xff] %v227
  %290 = vst [vmem:[%s3 + $0x158] sm:$0xff] %v230
  %291 = vst [vmem:[%s3 + $0x160] sm:$0xff] %v233
  %292 = vst [vmem:[%s3 + $0x168] sm:$0xff] %v236
  %293 = vst [vmem:[%s3 + $0x170] sm:$0xff] %v239
  %294 = vst [vmem:[%s3 + $0x178] sm:$0xff] %v242
  %295 = vst [vmem:[%s3 + $0x180] sm:$0xff] %v245
  // Predicated region
  $region14: #{conv2d_forward.1} parent=0 // pred_check
    _
  $region15: #{conv2d_forward.1} parent=0 // pred_check_branch
    %297 = sbr.rel (0) target = $region17
  $region16: #{conv2d_forward.1} parent=0 // pred_region
    _
  $region17: #{conv2d_forward.1} parent=0 // pred_fallthru
    _
  // Predicated region
  $region18: #{conv2d_forward.1} parent=0 // pred_check
    _
  $region19: #{conv2d_forward.1} parent=0 // pred_check_branch
    %299 = sbr.rel (0) target = $region21
  $region20: #{conv2d_forward.1} parent=0 // pred_region
    _
  $region21: #{conv2d_forward.1} parent=0 // pred_fallthru
    _

</llo_original>
